<compile_context>
chip_gen: v5e
topology: v5e:2x2
jax: 0.10.0
libtpu: 0.0.40
codegen_flags: <defaults>
</compile_context>

<pallas_src>
import functools

import jax
import jax.numpy as jnp
from jax.experimental import pallas as pl
from jax.experimental.pallas import tpu as pltpu


def _round_up(n, m):
    return ((n + m - 1) // m) * m


def encoder_kernel(contT_ref, code_ref, w1T_ref, w2T_ref, outT_ref, *,
                   n_oh_rows, n_codes):
    """One batch tile (batch on the lane axis): fused one-hot embedding lookup +
    2-layer ReLU MLP, biases folded into the weight packs."""
    cdt = w1T_ref.dtype
    tb = contT_ref.shape[1]

    # Combined (month, sex) one-hot + constant-1 bias carry row, built on the VPU.
    # Rows [0, n_codes): one-hot of code = month + n_month * sex.
    # Row n_codes: constant 1 (bias carry). Rows beyond that: K padding, stay 0.
    code = code_ref[...]                                       # (1, tb) int32
    row = jax.lax.broadcasted_iota(jnp.int32, (n_oh_rows, tb), 0)
    oh = ((row == code) | (row == n_codes)).astype(cdt)        # (n_oh_rows, tb)

    # Single fused layer-1 operand: [cont^T ; one-hot block] -> (Kp, tb).
    fused = jnp.concatenate([contT_ref[...], oh], axis=0)

    # Layer 1: ONE MXU dot. w1T pack rows = [W1^T | b1-col | carry-row].
    h1 = jnp.dot(w1T_ref[...], fused, preferred_element_type=jnp.float32)
    h1 = jnp.maximum(h1, 0.0)                                  # (H1e, tb); carry row == 1

    # Layer 2: w2T pack's last used column is b2 (pairs with the carry row).
    h2 = jnp.dot(w2T_ref[...], h1.astype(cdt), preferred_element_type=jnp.float32)
    outT_ref[...] = jnp.maximum(h2, 0.0).astype(outT_ref.dtype)


def base_encoder_forward(x, params, *, block_b=8192,
                         compute_dtype=jnp.bfloat16, out_dtype=None):
    """x: dict of arrays; params: dict of weights. Returns (B, H2)."""
    if out_dtype is None:
        out_dtype = compute_dtype
    f32 = jnp.float32
    hi = jax.lax.Precision.HIGHEST

    cont = jnp.concatenate(
        [x['birth_coords'], x['home_coords'], x['numeric']], axis=1)   # (B, d_cont)
    B, d_cont = cont.shape
    n_month, _ = params['month_table'].shape
    n_sex, _ = params['sex_table'].shape
    h1_dim, h2_dim = params['w2'].shape
    n_codes = n_month * n_sex

    # Clamp indices (torch Embedding errors on OOB; we clamp defensively).
    month = jnp.clip(x['month'].astype(jnp.int32), 0, n_month - 1)
    sex = jnp.clip(x['sex'].astype(jnp.int32), 0, n_sex - 1)
    code = month + n_month * sex                                # (B,) in [0, n_codes)

    # --- Tile-friendly padded dimensions ------------------------------------
    sub = 16 if compute_dtype == jnp.bfloat16 else 8            # sublane tile
    d_cont_p = _round_up(d_cont, sub)                           # aligned concat boundary
    Kp = _round_up(d_cont_p + n_codes + 1, sub)                 # fused layer-1 K
    n_oh_rows = Kp - d_cont_p
    H1e = _round_up(h1_dim + 1, sub)                            # hidden + carry row
    H2p = _round_up(h2_dim, 8)                                  # output sublane dim

    # --- Fold embeddings + biases into transposed weight packs (exact, f32) --
    # one_hot(code) @ W_comb == month_table[month] @ w1_month + sex_table[sex] @ w1_sex
    w1m = jnp.dot(params['month_table'].astype(f32),
                  params['w1_month'].astype(f32), precision=hi)          # (n_month, H1)
    w1s = jnp.dot(params['sex_table'].astype(f32),
                  params['w1_sex'].astype(f32), precision=hi)            # (n_sex, H1)
    w_comb = (w1s[:, None, :] + w1m[None, :, :]).reshape(n_codes, h1_dim)  # code = m + 12*s

    # Layer-1 pack (H1e, Kp). Columns: [cont rows | cont pad | combined rows | b1 | pad].
    # Row h1_dim is the carry row: it selects the constant-1 one-hot row so
    # ReLU(h1[h1_dim]) == 1 feeds b2 in layer 2. Rows above are zero padding.
    w1T = jnp.zeros((H1e, Kp), f32)
    w1T = w1T.at[:h1_dim, :d_cont].set(params['w1_cont'].astype(f32).T)
    w1T = w1T.at[:h1_dim, d_cont_p:d_cont_p + n_codes].set(w_comb.T)
    w1T = w1T.at[:h1_dim, d_cont_p + n_codes].set(params['b1'].astype(f32).reshape(-1))
    w1T = w1T.at[h1_dim, d_cont_p + n_codes].set(1.0)

    # Layer-2 pack (H2p, H1e): columns [W2^T | b2 | zero padding].
    w2T = jnp.zeros((H2p, H1e), f32)
    w2T = w2T.at[:h2_dim, :h1_dim].set(params['w2'].astype(f32).T)
    w2T = w2T.at[:h2_dim, h1_dim].set(params['b2'].astype(f32).reshape(-1))

    w1T = w1T.astype(compute_dtype)
    w2T = w2T.astype(compute_dtype)

    # --- Batch tiling (batch on the 128-lane axis) ---------------------------
    # Cap the tile so realistic batches get >=2 grid steps (v7x: both TCs busy).
    tb = min(block_b, _round_up(max(B // 2, 1), 128))
    tb = max(128, (tb // 128) * 128)
    Bp = _round_up(B, tb)

    contT = jnp.pad(cont.astype(compute_dtype).T,
                    ((0, d_cont_p - d_cont), (0, Bp - B)))      # (d_cont_p, Bp)
    codeT = jnp.pad(code.reshape(1, B), ((0, 0), (0, Bp - B)))  # (1, Bp); pad=0 (valid)

    grid = (Bp // tb,)
    bpe = jnp.dtype(compute_dtype).itemsize
    out_bpe = jnp.dtype(out_dtype).itemsize
    pack_bytes = (H1e * Kp + H2p * H1e) * bpe

    cost = pl.CostEstimate(
        flops=int(2 * Bp * (Kp * H1e + H1e * H2p)),
        transcendentals=0,
        bytes_accessed=int(Bp * (d_cont_p * bpe + 4 + H2p * out_bpe) + pack_bytes),
    )

    # VMEM budget from the actual (double-buffered) tile footprint + headroom,
    # so large tiles stay safely inside v7x's 64 MiB part (and above v5e's 16 MiB
    # default scoped limit when needed).
    tile_bytes = 2 * (d_cont_p * tb * bpe          # contT block
                      + 8 * tb * 4                 # code block (sublane-padded int32)
                      + H2p * tb * out_bpe         # out block
                      + pack_bytes)                # resident packs
    vmem_limit = min(32 << 20, max(8 << 20, 2 * tile_bytes + (2 << 20)))

    kernel = functools.partial(encoder_kernel, n_oh_rows=n_oh_rows, n_codes=n_codes)

    outT = pl.pallas_call(
        kernel,
        out_shape=jax.ShapeDtypeStruct((H2p, Bp), out_dtype),
        grid=grid,
        in_specs=[
            pl.BlockSpec((d_cont_p, tb), lambda i: (0, i)),     # cont^T (lane-dense)
            pl.BlockSpec((1, tb), lambda i: (0, i)),            # combined int32 codes
            pl.BlockSpec((H1e, Kp), lambda i: (0, 0)),          # resident layer-1 pack
            pl.BlockSpec((H2p, H1e), lambda i: (0, 0)),         # resident layer-2 pack
        ],
        out_specs=pl.BlockSpec((H2p, tb), lambda i: (0, i)),    # out^T (lane-dense)
        compiler_params=pltpu.CompilerParams(
            dimension_semantics=("parallel",),
            vmem_limit_bytes=int(vmem_limit),
        ),
        cost_estimate=cost,
    )(contT, codeT, w1T, w2T)

    return outT[:h2_dim, :B].T.astype(out_dtype)


def make_params(key, d_cont, month_dim, sex_dim, h1, h2):
    ks = jax.random.split(key, 8)
    return {
        'month_table': jax.random.normal(ks[0], (12, month_dim), jnp.float32),
        'sex_table':   jax.random.normal(ks[1], (2, sex_dim), jnp.float32),
        'w1_cont':     jax.random.normal(ks[2], (d_cont, h1), jnp.float32) * 0.1,
        'w1_month':    jax.random.normal(ks[3], (month_dim, h1), jnp.float32) * 0.1,
        'w1_sex':      jax.random.normal(ks[4], (sex_dim, h1), jnp.float32) * 0.1,
        'b1':          jax.random.normal(ks[5], (1, h1), jnp.float32) * 0.1,
        'w2':          jax.random.normal(ks[6], (h1, h2), jnp.float32) * 0.1,
        'b2':          jax.random.normal(ks[7], (1, h2), jnp.float32) * 0.1,
    }


def reference_forward(x, params):
    """Plain-JAX reference mirroring the PyTorch module."""
    m_emb = params['month_table'][x['month']]
    s_emb = params['sex_table'][x['sex']]
    xc = jnp.concatenate([x['birth_coords'], x['home_coords'], x['numeric'],
                          m_emb, s_emb], axis=1)
    w1 = jnp.concatenate([params['w1_cont'], params['w1_month'], params['w1_sex']],
                         axis=0)
    h = jax.nn.relu(xc @ w1 + params['b1'])
    return jax.nn.relu(h @ params['w2'] + params['b2'])


def _make_inputs(key, B, n_num):
    kb, kh, kn, km, ks = jax.random.split(key, 5)
    return {
        'birth_coords': jax.random.normal(kb, (B, 2), jnp.float32),
        'home_coords':  jax.random.normal(kh, (B, 2), jnp.float32),
        'numeric':      jax.random.normal(kn, (B, n_num), jnp.float32),
        'month':        jax.random.randint(km, (B,), 0, 12),
        'sex':          jax.random.randint(ks, (B,), 0, 2),
    }


if __name__ == "__main__":
    key = jax.random.PRNGKey(0)
    k_in1, k_in2, k_par = jax.random.split(key, 3)

    N_NUM = 4       # numeric features
    MONTH_DIM = 8   # month_emb_dim
    SEX_DIM = 8     # sex_emb_dim
    H1, H2 = 32, 16  # hidden_layers

    params = make_params(k_par, d_cont=2 + 2 + N_NUM,
                         month_dim=MONTH_DIM, sex_dim=SEX_DIM, h1=H1, h2=H2)

    # Case 1: tiny batch (B < one 128-lane tile) -> exercises lane padding.
    x1 = _make_inputs(k_in1, B=20, n_num=N_NUM)
    ref1 = reference_forward(x1, params)
    out1 = jax.block_until_ready(
        base_encoder_forward(x1, params, compute_dtype=jnp.float32))
    assert out1.shape == (20, H2)
    assert jnp.allclose(out1, ref1, atol=1e-4, rtol=1e-4), "f32 mismatch (B=20)"

    # Case 2: multi-step grid with batch padding (B=300, tile=128 -> 3 steps).
    x2 = _make_inputs(k_in2, B=300, n_num=N_NUM)
    ref2 = reference_forward(x2, params)
    out2_f32 = jax.block_until_ready(
        base_encoder_forward(x2, params, block_b=128, compute_dtype=jnp.float32))
    assert out2_f32.shape == (300, H2)
    assert jnp.allclose(out2_f32, ref2, atol=1e-4, rtol=1e-4), "f32 mismatch (B=300)"

    # bf16 path (default): bandwidth/MXU-optimized configuration.
    out2_bf16 = jax.block_until_ready(
        base_encoder_forward(x2, params, block_b=128))
    assert out2_bf16.shape == (300, H2)
    assert jnp.allclose(out2_bf16.astype(jnp.float32), ref2, atol=5e-2, rtol=5e-2), \
        "bf16 mismatch vs reference"

    print("KERNEL_OK")
</pallas_src>

<mosaic_0001>
module attributes {stable_mosaic.version = 11 : i64} {
  func.func @encoder_kernel(%arg0: i32, %arg1: memref<8x128xf32, #tpu.memory_space<vmem>>, %arg2: memref<1x128xi32, #tpu.memory_space<vmem>>, %arg3: memref<40x40xf32, #tpu.memory_space<vmem>>, %arg4: memref<16x40xf32, #tpu.memory_space<vmem>>, %arg5: memref<16x128xf32, #tpu.memory_space<vmem>>) attributes {dimension_semantics = [#tpu.dimension_semantics<parallel>], iteration_bounds = array<i64: 1>, scalar_prefetch = 0 : i64, scratch_operands = 0 : i64, tpu.core_type = #tpu.core_type<tc>, window_params = [{transform_indices = @transform_0, window_bounds = array<i64: 8, 128>}, {transform_indices = @transform_1, window_bounds = array<i64: 1, 128>}, {pipeline_mode = #tpu.pipeline_mode<synchronous>, transform_indices = @transform_2, window_bounds = array<i64: 40, 40>}, {pipeline_mode = #tpu.pipeline_mode<synchronous>, transform_indices = @transform_3, window_bounds = array<i64: 16, 40>}, {transform_indices = @transform_4, window_bounds = array<i64: 16, 128>}]} {
    %c0 = arith.constant 0 : index
    %c0_0 = arith.constant 0 : index
    %0 = vector.load %arg2[%c0, %c0_0] : memref<1x128xi32, #tpu.memory_space<vmem>>, vector<1x128xi32>
    %1 = tpu.iota {dimensions = array<i32: 0>} : vector<32x128xi32>
    %2 = vector.broadcast %0 : vector<1x128xi32> to vector<32x128xi32>
    %3 = arith.cmpi eq, %1, %2 : vector<32x128xi32>
    %c24_i32 = arith.constant 24 : i32
    %4 = vector.broadcast %c24_i32 : i32 to vector<32x128xi32>
    %5 = arith.cmpi eq, %1, %4 : vector<32x128xi32>
    %6 = arith.ori %3, %5 : vector<32x128xi1>
    %7 = arith.extui %6 : vector<32x128xi1> to vector<32x128xi32>
    %8 = arith.sitofp %7 : vector<32x128xi32> to vector<32x128xf32>
    %c0_1 = arith.constant 0 : index
    %c0_2 = arith.constant 0 : index
    %9 = vector.load %arg1[%c0_1, %c0_2] : memref<8x128xf32, #tpu.memory_space<vmem>>, vector<8x128xf32>
    %10 = tpu.concatenate %9, %8 in 0 : vector<8x128xf32>, vector<32x128xf32> -> vector<40x128xf32>
    %c0_3 = arith.constant 0 : index
    %c0_4 = arith.constant 0 : index
    %11 = vector.load %arg3[%c0_3, %c0_4] : memref<40x40xf32, #tpu.memory_space<vmem>>, vector<40x40xf32>
    %cst = arith.constant dense<0.000000e+00> : vector<40x128xf32>
    %12 = tpu.matmul %11, %10, %cst {dimension_numbers = #tpu.dot_dimension_numbers<[1], [0], [0], [1], [0, 0, 1, 1], [], []>} : vector<40x40xf32>, vector<40x128xf32>, vector<40x128xf32> -> vector<40x128xf32>
    %cst_5 = arith.constant 0.000000e+00 : f32
    %13 = vector.broadcast %cst_5 : f32 to vector<40x128xf32>
    %14 = arith.maximumf %12, %13 : vector<40x128xf32>
    %c0_6 = arith.constant 0 : index
    %c0_7 = arith.constant 0 : index
    %15 = vector.load %arg4[%c0_6, %c0_7] : memref<16x40xf32, #tpu.memory_space<vmem>>, vector<16x40xf32>
    %cst_8 = arith.constant dense<0.000000e+00> : vector<16x128xf32>
    %16 = tpu.matmul %15, %14, %cst_8 {dimension_numbers = #tpu.dot_dimension_numbers<[1], [0], [0], [1], [0, 0, 1, 1], [], []>} : vector<16x40xf32>, vector<40x128xf32>, vector<16x128xf32> -> vector<16x128xf32>
    %cst_9 = arith.constant 0.000000e+00 : f32
    %17 = vector.broadcast %cst_9 : f32 to vector<16x128xf32>
    %18 = arith.maximumf %16, %17 : vector<16x128xf32>
    %c0_10 = arith.constant 0 : index
    %c0_11 = arith.constant 0 : index
    %19 = vector.load %arg5[%c0_10, %c0_11] : memref<16x128xf32, #tpu.memory_space<vmem>>, vector<16x128xf32>
    tpu.vector_store %arg5[%c0_10, %c0_11], %18 {strides = array<i32>} : memref<16x128xf32, #tpu.memory_space<vmem>>, vector<16x128xf32>,
    return
  }
  func.func @transform_0(%arg0: i32) -> (i32, i32) {
    %c0_i32 = arith.constant 0 : i32
    %c0_i32_0 = arith.constant 0 : i32
    return %c0_i32, %arg0 : i32, i32
  }
  func.func @transform_1(%arg0: i32) -> (i32, i32) {
    %c0_i32 = arith.constant 0 : i32
    %c0_i32_0 = arith.constant 0 : i32
    return %c0_i32, %arg0 : i32, i32
  }
  func.func @transform_2(%arg0: i32) -> (i32, i32) {
    %c0_i32 = arith.constant 0 : i32
    %c0_i32_0 = arith.constant 0 : i32
    %c0_i32_1 = arith.constant 0 : i32
    return %c0_i32, %c0_i32_0 : i32, i32
  }
  func.func @transform_3(%arg0: i32) -> (i32, i32) {
    %c0_i32 = arith.constant 0 : i32
    %c0_i32_0 = arith.constant 0 : i32
    %c0_i32_1 = arith.constant 0 : i32
    return %c0_i32, %c0_i32_0 : i32, i32
  }
  func.func @transform_4(%arg0: i32) -> (i32, i32) {
    %c0_i32 = arith.constant 0 : i32
    %c0_i32_0 = arith.constant 0 : i32
    return %c0_i32, %arg0 : i32, i32
  }
}

</mosaic_0001>

<llo_original>
// kernel: tpu_custom_call.1
$region0: #{tpu_custom_call.1}
  #allocation0 [shape = 'u32[]', space=smem, size = 0x4, offset = 0x4, fixed_abs, tag = 'smem constant byte address 0x4 - core index']
  #allocation1 [shape = 'u32[72,128]{1,0:T(1,128)}', space=vmem, size = 0x9000, scoped, tag = 'internal scratch']
  %s0 = inlined_call_operand.hbm [shape: f32[8,128], index: 0, kind: input, shape index: {}]
  %s1 = inlined_call_operand.hbm [shape: s32[1,128], index: 1, kind: input, shape index: {}]
  %s2 = inlined_call_operand.hbm [shape: f32[40,40], index: 2, kind: input, shape index: {}]
  %s3 = inlined_call_operand.hbm [shape: f32[16,40], index: 3, kind: input, shape index: {}]
  %s4 = inlined_call_operand.hbm [shape: f32[16,128], index: 4, kind: output, shape index: {}]
  %s5 = sld [smem:[#allocation0]]
  $region42: #{tpu_custom_call.1} parent=0
    _
  %s7 = ssub.s32 1, %s5
  %s8 = scalar_select 0, %s7, %s5
  $region1: #{tpu_custom_call.1} parent=0
    #allocation2 [shape = 'u8[4096]{0}', space=vmem, size = 0x1000, scoped, tag = 'input window, operand 0, single buffered']
    #allocation3 [shape = 's32[1]{0}', space=sflag, size = 0x4, scoped, tag = 'scoped memory for tpu_custom_call.1']
    #allocation4 [shape = 's32[1]{0}', space=sflag, size = 0x4, scoped, tag = 'scoped memory for tpu_custom_call.1']
    #allocation5 [shape = 'u8[512]{0}', space=vmem, size = 0x400, scoped, tag = 'input window, operand 1, single buffered']
    #allocation6 [shape = 's32[1]{0}', space=sflag, size = 0x4, scoped, tag = 'scoped memory for tpu_custom_call.1']
    #allocation7 [shape = 'u8[20480]{0}', space=vmem, size = 0x5000, scoped, tag = 'input window, operand 2, single buffered']
    #allocation8 [shape = 'u8[8192]{0}', space=vmem, size = 0x2000, scoped, tag = 'input window, operand 3, single buffered']
    #allocation9 [shape = 's32[1]{0}', space=sflag, size = 0x4, scoped, tag = 'scoped memory for tpu_custom_call.1']
    #allocation10 [shape = 'u8[8192]{0}', space=vmem, size = 0x2000, scoped, tag = 'output window, operand 0, single buffered']
    %9 = vsyncpa [#allocation3], 0
    %10 = vsyncpa [#allocation6], 0
    %11 = vsyncpa [#allocation9], 0
    %12 = vsyncpa [#allocation4], 0
    // Predicated region
    $region2: #{tpu_custom_call.1} parent=1 // pred_check
      _
    $region3: #{tpu_custom_call.1} parent=1 // pred_check_branch
      %14 = sbr.rel (0) target = $region5
    $region4: #{tpu_custom_call.1} parent=1 // pred_region
      %16 = vsyncadd [#allocation3], 0
      %s18 = sshll.u32 %s0, 4
      %s19 = int_to_ptr.hbm [resolvable:$true] %s18
      %s20 = sshll.u32 [#allocation2], 4
      %s21 = int_to_ptr.vmem [resolvable:$true] %s20
      %23 = dma.hbm_to_vmem [thread:$0]  %s19, 128, %s21, [#allocation3]
    $region5: #{tpu_custom_call.1} parent=1 // pred_fallthru
      _
    // Predicated region
    $region6: #{tpu_custom_call.1} parent=1 // pred_check
      _
    $region7: #{tpu_custom_call.1} parent=1 // pred_check_branch
      %25 = sbr.rel (0) target = $region9
    $region8: #{tpu_custom_call.1} parent=1 // pred_region
      %27 = vsyncadd [#allocation6], 0
      %s29 = sshll.u32 %s1, 4
      %s30 = int_to_ptr.hbm [resolvable:$true] %s29
      %s31 = sshll.u32 [#allocation5], 4
      %s32 = int_to_ptr.vmem [resolvable:$true] %s31
      %34 = dma.hbm_to_vmem [thread:$0]  %s30, 16, %s32, [#allocation6]
    $region9: #{tpu_custom_call.1} parent=1 // pred_fallthru
      _
    // Predicated region
    $region10: #{tpu_custom_call.1} parent=1 // pred_check
      _
    $region11: #{tpu_custom_call.1} parent=1 // pred_check_branch
      %36 = sbr.rel (0) target = $region13
    $region12: #{tpu_custom_call.1} parent=1 // pred_region
      %38 = vsyncadd [#allocation6], 0
      %s39 = sshll.u32 %s2, 4
      %s40 = int_to_ptr.hbm [resolvable:$true] %s39
      %s41 = sshll.u32 [#allocation7], 4
      %s42 = int_to_ptr.vmem [resolvable:$true] %s41
      %47 = dma.hbm_to_vmem [thread:$0]  %s40, 640, %s42, [#allocation6], 128, 128, 8
    $region13: #{tpu_custom_call.1} parent=1 // pred_fallthru
      _
    // Predicated region
    $region14: #{tpu_custom_call.1} parent=1 // pred_check
      _
    $region15: #{tpu_custom_call.1} parent=1 // pred_check_branch
      %49 = sbr.rel (0) target = $region17
    $region16: #{tpu_custom_call.1} parent=1 // pred_region
      %51 = vsyncadd [#allocation9], 0
      %s52 = sshll.u32 %s3, 4
      %s53 = int_to_ptr.hbm [resolvable:$true] %s52
      %s54 = sshll.u32 [#allocation8], 4
      %s55 = int_to_ptr.vmem [resolvable:$true] %s54
      %60 = dma.hbm_to_vmem [thread:$0]  %s53, 256, %s55, [#allocation9], 128, 128, 8
    $region17: #{tpu_custom_call.1} parent=1 // pred_fallthru
      _
    // Predicated region
    $region18: #{tpu_custom_call.1} parent=1 // pred_check
      _
    $region19: #{tpu_custom_call.1} parent=1 // pred_check_branch
      %62 = sbr.rel (0) target = $region21
    $region20: #{tpu_custom_call.1} parent=1 // pred_region
      %64 = dma.done [#allocation3], 128
    $region21: #{tpu_custom_call.1} parent=1 // pred_fallthru
      _
    // Predicated region
    $region22: #{tpu_custom_call.1} parent=1 // pred_check
      _
    $region23: #{tpu_custom_call.1} parent=1 // pred_check_branch
      %66 = sbr.rel (0) target = $region25
    $region24: #{tpu_custom_call.1} parent=1 // pred_region
      %68 = dma.done [#allocation6], 16
    $region25: #{tpu_custom_call.1} parent=1 // pred_fallthru
      _
    // Predicated region
    $region26: #{tpu_custom_call.1} parent=1 // pred_check
      _
    $region27: #{tpu_custom_call.1} parent=1 // pred_check_branch
      %70 = sbr.rel (0) target = $region29
    $region28: #{tpu_custom_call.1} parent=1 // pred_region
      %72 = dma.done [#allocation6], 640
    $region29: #{tpu_custom_call.1} parent=1 // pred_fallthru
      _
    // Predicated region
    $region30: #{tpu_custom_call.1} parent=1 // pred_check
      _
    $region31: #{tpu_custom_call.1} parent=1 // pred_check_branch
      %74 = sbr.rel (0) target = $region33
    $region32: #{tpu_custom_call.1} parent=1 // pred_region
      %76 = dma.done [#allocation9], 256
    $region33: #{tpu_custom_call.1} parent=1 // pred_fallthru
      _
    %v77 = vld [vmem:[#allocation5] sm:$0x1]
    %v78 = vlaneseq
    %v79 = vshrl.u32 %v78, 7
    %v80 = vadd.s32 %v79, 8
    %v81 = vadd.s32 %v79, 16
    %v82 = vadd.s32 %v79, 24
    %v83 = vperm.slane %v77, 0
    %vm84 = vcmp.eq.s32.totalorder %v79, %v83
    %vm85 = vcmp.eq.s32.totalorder %v80, %v83
    %vm86 = vcmp.eq.s32.totalorder %v81, %v83
    %vm87 = vcmp.eq.s32.totalorder %v82, %v83
    %vm88 = vcmp.eq.s32.totalorder %v79, 24
    %vm89 = vcmp.eq.s32.totalorder %v80, 24
    %vm90 = vcmp.eq.s32.totalorder %v81, 24
    %vm91 = vcmp.eq.s32.totalorder %v82, 24
    %vm92 = vmor %vm84, %vm88
    %vm93 = vmor %vm85, %vm89
    %vm94 = vmor %vm86, %vm90
    %vm95 = vmor %vm87, %vm91
    %v96 = vsel %vm92, 1, 0
    %v97 = vsel %vm93, 1, 0
    %v98 = vsel %vm94, 1, 0
    %v99 = vsel %vm95, 1, 0
    %v100 = vcvt.s32.f32 %v96
    %v101 = vcvt.s32.f32 %v97
    %v102 = vcvt.s32.f32 %v98
    %v103 = vcvt.s32.f32 %v99
    %v104 = vld [vmem:[#allocation2] sm:$0xff]
    %v105 = vld [vmem:[#allocation7] sm:$0xff]
    %v106 = vld [vmem:[#allocation7 + $0x8] sm:$0xff]
    %v107 = vld [vmem:[#allocation7 + $0x10] sm:$0xff]
    %v108 = vld [vmem:[#allocation7 + $0x18] sm:$0xff]
    %v109 = vld [vmem:[#allocation7 + $0x20] sm:$0xff]
    %vm110 = vcmask 326656
    %v112 = vsel %vm110, %v105, 0
    %v115 = vsel %vm110, %v106, 0
    %v118 = vsel %vm110, %v107, 0
    %v121 = vsel %vm110, %v108, 0
    %v124 = vsel %vm110, %v109, 0
    %126 = vmatpush.msra.mxu0 0.0
    %127 = vmatpush.msra.mxu0 0.0
    %128 = vmatpush.msra.mxu0 0.0
    %129 = vmatpush.msra.mxu0 0.0
    %130 = vmatpush.msra.mxu0 0.0
    %131 = vmatpush.msra.mxu0 0.0
    %132 = vmatpush.msra.mxu0 0.0
    %133 = vmatpush.msra.mxu0 0.0
    %134 = vmatpush.msra.mxu0 0.0
    %135 = vmatpush.msra.mxu0 0.0
    %136 = vmatpush.msra.mxu0 0.0
    %137 = vmatpush.msra.mxu0 %v103
    %138 = vmatpush.msra.mxu0 %v102
    %139 = vmatpush.msra.mxu0 %v101
    %140 = vmatpush.msra.mxu0 %v100
    %141 = vmatpush.msra.mxu0 %v104
    %142 = vmatmul.f32.gmra.mxu0 %v112
    %v143 = vpop.f32.mrf.mxu0
    %v144 = vadd.f32 0.0, %v143
    %145 = vmatmul.f32.gmra.mxu0 %v115
    %v146 = vpop.f32.mrf.mxu0
    %v147 = vadd.f32 0.0, %v146
    %148 = vmatmul.f32.gmra.mxu0 %v118
    %v149 = vpop.f32.mrf.mxu0
    %v150 = vadd.f32 0.0, %v149
    %151 = vmatmul.f32.gmra.mxu0 %v121
    %v152 = vpop.f32.mrf.mxu0
    %v153 = vadd.f32 0.0, %v152
    %154 = vmatmul.f32.gmra.mxu0 %v124
    %v155 = vpop.f32.mrf.mxu0
    %v156 = vadd.f32 0.0, %v155
    %157 = vdwg.mxu0
    %v158 = vmax.f32 %v144, 0.0
    %v159 = vmax.f32 %v147, 0.0
    %v160 = vmax.f32 %v150, 0.0
    %v161 = vmax.f32 %v153, 0.0
    %v162 = vmax.f32 %v156, 0.0
    %v163 = vld [vmem:[#allocation8] sm:$0xff]
    %v164 = vld [vmem:[#allocation8 + $0x8] sm:$0xff]
    %v166 = vsel %vm110, %v163, 0
    %v169 = vsel %vm110, %v164, 0
    %171 = vmatpush.msra.mxu0 0.0
    %172 = vmatpush.msra.mxu0 0.0
    %173 = vmatpush.msra.mxu0 0.0
    %174 = vmatpush.msra.mxu0 0.0
    %175 = vmatpush.msra.mxu0 0.0
    %176 = vmatpush.msra.mxu0 0.0
    %177 = vmatpush.msra.mxu0 0.0
    %178 = vmatpush.msra.mxu0 0.0
    %179 = vmatpush.msra.mxu0 0.0
    %180 = vmatpush.msra.mxu0 0.0
    %181 = vmatpush.msra.mxu0 0.0
    %182 = vmatpush.msra.mxu0 %v162
    %183 = vmatpush.msra.mxu0 %v161
    %184 = vmatpush.msra.mxu0 %v160
    %185 = vmatpush.msra.mxu0 %v159
    %186 = vmatpush.msra.mxu0 %v158
    %187 = vmatmul.f32.gmra.mxu0 %v166
    %v188 = vpop.f32.mrf.mxu0
    %v189 = vadd.f32 0.0, %v188
    %190 = vmatmul.f32.gmra.mxu0 %v169
    %v191 = vpop.f32.mrf.mxu0
    %v192 = vadd.f32 0.0, %v191
    %193 = vdwg.mxu0
    %v194 = vmax.f32 %v189, 0.0
    %v195 = vmax.f32 %v192, 0.0
    %196 = vst [vmem:[#allocation10] sm:$0xff] %v194
    %197 = vst [vmem:[#allocation10 + $0x8] sm:$0xff] %v195
    // Predicated region
    $region34: #{tpu_custom_call.1} parent=1 // pred_check
      _
    $region35: #{tpu_custom_call.1} parent=1 // pred_check_branch
      %199 = sbr.rel (0) target = $region37
    $region36: #{tpu_custom_call.1} parent=1 // pred_region
      %201 = vsyncadd [#allocation4], 0
      %s202 = sshll.u32 [#allocation10], 4
      %s203 = int_to_ptr.vmem [resolvable:$true] %s202
      %s204 = sshll.u32 %s4, 4
      %s205 = int_to_ptr.hbm [resolvable:$true] %s204
      %210 = dma.vmem_to_hbm [thread:$0]  %s203, 256, %s205, [#allocation4], 128, 128, 8
    $region37: #{tpu_custom_call.1} parent=1 // pred_fallthru
      _
    // Predicated region
    $region38: #{tpu_custom_call.1} parent=1 // pred_check
      _
    $region39: #{tpu_custom_call.1} parent=1 // pred_check_branch
      %212 = sbr.rel (0) target = $region41
    $region40: #{tpu_custom_call.1} parent=1 // pred_region
      %214 = dma.done [#allocation4], 256
    $region41: #{tpu_custom_call.1} parent=1 // pred_fallthru
      _
    %215 = vsyncpa [#allocation3], 1
    %216 = vsyncpa [#allocation6], 1
    %217 = vsyncpa [#allocation9], 1
    %218 = vsyncpa [#allocation4], 1

</llo_original>
